<compile_context>
chip_gen: v5e
topology: v5e:2x2
jax: 0.10.0
libtpu: 0.0.40
codegen_flags: <defaults>
</compile_context>

<pallas_src>
import jax
import jax.numpy as jnp
from jax.experimental import pallas as pl
from jax.experimental.pallas import tpu as pltpu


def attention_kernel(v_ref, qmid_ref, wvT_ref, wxT_ref, bx_ref, o_ref):
    # v_ref   : (1, Cv, T_HW)   pixels for (batch n, pixel-tile t), channels on sublanes
    # qmid_ref: (1, mid, 1)     precomputed q_lin output for batch n (f32 column)
    # wvT_ref : (mid, Cv)       v_conv weight, pre-transposed (compute dtype)
    # wxT_ref : (G, mid)        x_conv weight, pre-transposed (compute dtype)
    # bx_ref  : (G, 1)          x_conv bias (f32 column)
    # o_ref   : (1, G, T_HW)
    v = v_ref[0]                                   # (Cv, T_HW)
    q_col = qmid_ref[0]                            # (mid, 1), f32

    # v_conv (1x1 conv, no bias): (mid, Cv) @ (Cv, T_HW) on the MXU, f32 acc.
    v_mid = jnp.dot(wvT_ref[...], v, preferred_element_type=jnp.float32)   # (mid, T_HW)

    # Fusion: -(x - y)^2 + relu(x + y), q broadcast over the pixel (lane) axis.
    d = v_mid - q_col
    s = v_mid + q_col
    fused = jnp.maximum(s, 0.0) - d * d            # (mid, T_HW), f32

    # x_conv (1x1 conv with bias): (G, mid) @ (mid, T_HW) on the MXU, f32 acc.
    out = jnp.dot(wxT_ref[...], fused.astype(wxT_ref.dtype),
                  preferred_element_type=jnp.float32) + bx_ref[...]        # (G, T_HW)

    o_ref[0] = out.astype(o_ref.dtype)


def _pick_pixel_tile(hw: int) -> int:
    """Largest lane-dense tile (multiple of 128) that divides HW; else all pixels."""
    for t in (2048, 1024, 512, 256, 128):
        if hw % t == 0:
            return t
    return hw


def attention_forward(v, q, wv, wq, bq, wx, bx, *, compute_dtype=jnp.bfloat16):
    """v: (N, Cv, H, W) NCHW; q: (N, Qf). Returns (N, G, H, W) in v.dtype.

    Weight layouts (channels-last / pre-transposed vs PyTorch):
      wv: (Cv, mid)   <- Conv2d weight (mid, Cv, 1, 1)
      wq: (Qf, mid)   <- Linear weight (mid, Qf);   bq: (1, mid)
      wx: (mid, G)    <- Conv2d weight (G, mid, 1, 1); bx: (1, G)
    """
    N, Cv, H, W = v.shape
    HW = H * W
    mid = wv.shape[1]
    G = wx.shape[1]

    # Channels-on-sublanes / pixels-on-lanes: pure reshape, no HBM transpose.
    v_pix = v.reshape(N, Cv, HW).astype(compute_dtype)

    # Hoist the q path (tiny) out of the kernel: q_mid = q @ wq + bq, in f32,
    # shaped as a per-batch column (N, mid, 1) so it broadcasts over pixel lanes.
    q_mid = q.astype(jnp.float32) @ wq.astype(jnp.float32) + bq.reshape(1, mid).astype(jnp.float32)
    q_mid_col = q_mid.reshape(N, mid, 1)

    # Pre-transposed weights for the flipped layout.
    wvT = wv.T.astype(compute_dtype)               # (mid, Cv)
    wxT = wx.T.astype(compute_dtype)               # (G, mid)
    bx_col = bx.reshape(G, 1).astype(jnp.float32)  # (G, 1)

    t_hw = _pick_pixel_tile(HW)
    grid = (N, HW // t_hw)

    # TODO(synk): for production shapes on v7x (64 MiB VMEM), single-buffer the
    # invariant weight blocks (pipeline_mode=pl.Buffered(1)) and set
    # pltpu.CompilerParams(vmem_limit_bytes=...) explicitly.
    out_pix = pl.pallas_call(
        attention_kernel,
        out_shape=jax.ShapeDtypeStruct((N, G, HW), v.dtype),
        grid_spec=pltpu.PrefetchScalarGridSpec(
            num_scalar_prefetch=0,
            grid=grid,
            in_specs=[
                pl.BlockSpec((1, Cv, t_hw), lambda n, t: (n, 0, t)),  # v pixel tile
                pl.BlockSpec((1, mid, 1),   lambda n, t: (n, 0, 0)),  # q_mid column (this batch)
                pl.BlockSpec((mid, Cv),     lambda n, t: (0, 0)),     # v_conv weight (invariant)
                pl.BlockSpec((G, mid),      lambda n, t: (0, 0)),     # x_conv weight (invariant)
                pl.BlockSpec((G, 1),        lambda n, t: (0, 0)),     # x_conv bias (invariant)
            ],
            out_specs=pl.BlockSpec((1, G, t_hw), lambda n, t: (n, 0, t)),
        ),
        compiler_params=pltpu.CompilerParams(
            dimension_semantics=("parallel", "parallel")),
    )(v_pix, q_mid_col, wvT, wxT, bx_col)

    # (N, G, HW) already matches NCHW -> pure reshape, no transpose.
    return out_pix.reshape(N, G, H, W)


def attention_reference(v, q, wv, wq, bq, wx, bx):
    """Pure-JAX f32 reference matching the PyTorch forward."""
    v_nhwc = jnp.transpose(v, (0, 2, 3, 1))                   # (N,H,W,Cv)
    v_mid = v_nhwc @ wv                                       # (N,H,W,mid)
    q_mid = q @ wq + bq.reshape(1, -1)                        # (N,mid)
    q_t = q_mid[:, None, None, :]                             # tile over H,W
    fused = -(v_mid - q_t) ** 2 + jax.nn.relu(v_mid + q_t)
    out = fused @ wx + bx.reshape(1, -1)                      # (N,H,W,G)
    return jnp.transpose(out, (0, 3, 1, 2))                   # (N,G,H,W)


if __name__ == "__main__":
    # Small shapes consistent with the module.
    N, Cv, H, W = 2, 32, 16, 16      # v: (N, v_features, H, W)
    Qf, mid, G = 24, 64, 2           # q_features, mid_features, glimpses
    # drop=0.0 -> Dropout is identity (no-op at inference), modeled as such.

    key = jax.random.PRNGKey(0)
    kv, kq, k1, k2, k3, k4, k5 = jax.random.split(key, 7)

    v = jax.random.normal(kv, (N, Cv, H, W), dtype=jnp.float32)
    q = jax.random.normal(kq, (N, Qf), dtype=jnp.float32)

    wv = jax.random.normal(k1, (Cv, mid), dtype=jnp.float32) * 0.1
    wq = jax.random.normal(k2, (Qf, mid), dtype=jnp.float32) * 0.1
    bq = jax.random.normal(k3, (1, mid), dtype=jnp.float32) * 0.1
    wx = jax.random.normal(k4, (mid, G), dtype=jnp.float32) * 0.1
    bx = jax.random.normal(k5, (1, G), dtype=jnp.float32) * 0.1

    ref = attention_reference(v, q, wv, wq, bq, wx, bx)

    # f32 path: exact-semantics check against the reference.
    out_f32 = jax.block_until_ready(
        attention_forward(v, q, wv, wq, bq, wx, bx, compute_dtype=jnp.float32))
    assert out_f32.shape == (N, G, H, W), out_f32.shape
    assert jnp.allclose(out_f32, ref, atol=1e-4, rtol=1e-4), "f32 mismatch vs reference"

    # bf16 MXU path (default, recommended on v6e/v7x): looser tolerance.
    out_bf16 = jax.block_until_ready(
        attention_forward(v, q, wv, wq, bq, wx, bx, compute_dtype=jnp.bfloat16))
    assert out_bf16.shape == (N, G, H, W), out_bf16.shape
    assert jnp.allclose(out_bf16, ref, atol=1e-1, rtol=1e-1), "bf16 mismatch vs reference"

    print("KERNEL_OK")
</pallas_src>

<mosaic_0001>
module attributes {stable_mosaic.version = 11 : i64} {
  func.func @attention_kernel(%arg0: i32, %arg1: i32, %arg2: memref<1x32x256xf32, #tpu.memory_space<vmem>>, %arg3: memref<1x64x1xf32, #tpu.memory_space<vmem>>, %arg4: memref<64x32xf32, #tpu.memory_space<vmem>>, %arg5: memref<2x64xf32, #tpu.memory_space<vmem>>, %arg6: memref<2x1xf32, #tpu.memory_space<vmem>>, %arg7: memref<1x2x256xf32, #tpu.memory_space<vmem>>) attributes {dimension_semantics = [#tpu.dimension_semantics<parallel>, #tpu.dimension_semantics<parallel>], iteration_bounds = array<i64: 2, 1>, scalar_prefetch = 0 : i64, scratch_operands = 0 : i64, tpu.core_type = #tpu.core_type<tc>, window_params = [{transform_indices = @transform_0, window_bounds = array<i64: 1, 32, 256>}, {transform_indices = @transform_1, window_bounds = array<i64: 1, 64, 1>}, {pipeline_mode = #tpu.pipeline_mode<synchronous>, transform_indices = @transform_2, window_bounds = array<i64: 64, 32>}, {pipeline_mode = #tpu.pipeline_mode<synchronous>, transform_indices = @transform_3, window_bounds = array<i64: 2, 64>}, {pipeline_mode = #tpu.pipeline_mode<synchronous>, transform_indices = @transform_4, window_bounds = array<i64: 2, 1>}, {transform_indices = @transform_5, window_bounds = array<i64: 1, 2, 256>}]} {
    %c0 = arith.constant 0 : index
    %c0_0 = arith.constant 0 : index
    %c0_1 = arith.constant 0 : index
    %0 = vector.load %arg2[%c0, %c0_0, %c0_1] : memref<1x32x256xf32, #tpu.memory_space<vmem>>, vector<1x32x256xf32>
    %1 = vector.shape_cast %0 : vector<1x32x256xf32> to vector<32x256xf32>
    %c0_2 = arith.constant 0 : index
    %c0_3 = arith.constant 0 : index
    %c0_4 = arith.constant 0 : index
    %2 = vector.load %arg3[%c0_2, %c0_3, %c0_4] : memref<1x64x1xf32, #tpu.memory_space<vmem>>, vector<1x64x1xf32>
    %3 = vector.shape_cast %2 : vector<1x64x1xf32> to vector<64x1xf32>
    %c0_5 = arith.constant 0 : index
    %c0_6 = arith.constant 0 : index
    %4 = vector.load %arg4[%c0_5, %c0_6] : memref<64x32xf32, #tpu.memory_space<vmem>>, vector<64x32xf32>
    %cst = arith.constant dense<0.000000e+00> : vector<64x256xf32>
    %5 = tpu.matmul %4, %1, %cst {dimension_numbers = #tpu.dot_dimension_numbers<[1], [0], [0], [1], [0, 0, 1, 1], [], []>} : vector<64x32xf32>, vector<32x256xf32>, vector<64x256xf32> -> vector<64x256xf32>
    %6 = vector.broadcast %3 : vector<64x1xf32> to vector<64x256xf32>
    %7 = arith.subf %5, %6 : vector<64x256xf32>
    %8 = vector.broadcast %3 : vector<64x1xf32> to vector<64x256xf32>
    %9 = arith.addf %5, %8 : vector<64x256xf32>
    %cst_7 = arith.constant 0.000000e+00 : f32
    %10 = vector.broadcast %cst_7 : f32 to vector<64x256xf32>
    %11 = arith.maximumf %9, %10 : vector<64x256xf32>
    %12 = arith.mulf %7, %7 : vector<64x256xf32>
    %13 = arith.subf %11, %12 : vector<64x256xf32>
    %c0_8 = arith.constant 0 : index
    %c0_9 = arith.constant 0 : index
    %14 = vector.load %arg5[%c0_8, %c0_9] : memref<2x64xf32, #tpu.memory_space<vmem>>, vector<2x64xf32>
    %cst_10 = arith.constant dense<0.000000e+00> : vector<2x256xf32>
    %15 = tpu.matmul %14, %13, %cst_10 {dimension_numbers = #tpu.dot_dimension_numbers<[1], [0], [0], [1], [0, 0, 1, 1], [], []>} : vector<2x64xf32>, vector<64x256xf32>, vector<2x256xf32> -> vector<2x256xf32>
    %c0_11 = arith.constant 0 : index
    %c0_12 = arith.constant 0 : index
    %16 = vector.load %arg6[%c0_11, %c0_12] : memref<2x1xf32, #tpu.memory_space<vmem>>, vector<2x1xf32>
    %17 = vector.broadcast %16 : vector<2x1xf32> to vector<2x256xf32>
    %18 = arith.addf %15, %17 : vector<2x256xf32>
    %c0_13 = arith.constant 0 : index
    %c0_14 = arith.constant 0 : index
    %c0_15 = arith.constant 0 : index
    %19 = vector.load %arg7[%c0_13, %c0_14, %c0_15] : memref<1x2x256xf32, #tpu.memory_space<vmem>>, vector<1x2x256xf32>
    %20 = vector.shape_cast %19 : vector<1x2x256xf32> to vector<2x256xf32>
    %21 = vector.shape_cast %18 : vector<2x256xf32> to vector<1x2x256xf32>
    tpu.vector_store %arg7[%c0_13, %c0_14, %c0_15], %21 {strides = array<i32>} : memref<1x2x256xf32, #tpu.memory_space<vmem>>, vector<1x2x256xf32>,
    return
  }
  func.func @transform_0(%arg0: i32, %arg1: i32) -> (i32, i32, i32) {
    %c0_i32 = arith.constant 0 : i32
    %c0_i32_0 = arith.constant 0 : i32
    return %arg0, %c0_i32, %arg1 : i32, i32, i32
  }
  func.func @transform_1(%arg0: i32, %arg1: i32) -> (i32, i32, i32) {
    %c0_i32 = arith.constant 0 : i32
    %c0_i32_0 = arith.constant 0 : i32
    %c0_i32_1 = arith.constant 0 : i32
    return %arg0, %c0_i32, %c0_i32_0 : i32, i32, i32
  }
  func.func @transform_2(%arg0: i32, %arg1: i32) -> (i32, i32) {
    %c0_i32 = arith.constant 0 : i32
    %c0_i32_0 = arith.constant 0 : i32
    %c0_i32_1 = arith.constant 0 : i32
    return %c0_i32, %c0_i32_0 : i32, i32
  }
  func.func @transform_3(%arg0: i32, %arg1: i32) -> (i32, i32) {
    %c0_i32 = arith.constant 0 : i32
    %c0_i32_0 = arith.constant 0 : i32
    %c0_i32_1 = arith.constant 0 : i32
    return %c0_i32, %c0_i32_0 : i32, i32
  }
  func.func @transform_4(%arg0: i32, %arg1: i32) -> (i32, i32) {
    %c0_i32 = arith.constant 0 : i32
    %c0_i32_0 = arith.constant 0 : i32
    %c0_i32_1 = arith.constant 0 : i32
    return %c0_i32, %c0_i32_0 : i32, i32
  }
  func.func @transform_5(%arg0: i32, %arg1: i32) -> (i32, i32, i32) {
    %c0_i32 = arith.constant 0 : i32
    %c0_i32_0 = arith.constant 0 : i32
    return %arg0, %c0_i32, %arg1 : i32, i32, i32
  }
}

</mosaic_0001>

<llo_original>
// kernel: tpu_custom_call.1
$region0: #{tpu_custom_call.1}
  #allocation0 [shape = 'u32[]', space=smem, size = 0x4, offset = 0x4, fixed_abs, tag = 'smem constant byte address 0x4 - core index']
  #allocation1 [shape = 'u32[72,128]{1,0:T(1,128)}', space=vmem, size = 0x9000, scoped, tag = 'internal scratch']
  %s0 = inlined_call_operand.vmem [shape: f32[2,32,256], index: 0, kind: input, shape index: {}]
  %s1 = inlined_call_operand.vmem [shape: f32[2,64,1], index: 1, kind: input, shape index: {}]
  %s2 = inlined_call_operand.vmem [shape: f32[64,32], index: 2, kind: input, shape index: {}]
  %s3 = inlined_call_operand.vmem [shape: f32[2,64], index: 3, kind: input, shape index: {}]
  %s4 = inlined_call_operand.vmem [shape: f32[2,1], index: 4, kind: input, shape index: {}]
  %s5 = inlined_call_operand.hbm [shape: f32[2,2,256], index: 5, kind: output, shape index: {}]
  %s6 = sld [smem:[#allocation0]]
  $region53: #{tpu_custom_call.1} parent=0
    _
  %s8 = ssub.s32 1, %s6
  %s9 = scalar_select 0, %s8, %s6
  $region1: #{tpu_custom_call.1} parent=0
    #allocation2 [shape = 'u8[4096]{0}', space=vmem, size = 0x1000, scoped, tag = 'output window, operand 0']
    #allocation3 [shape = 's32[2]{0}', space=sflag, size = 0x8, scoped, tag = 'scoped memory for tpu_custom_call.1']
    %10 = vsyncpa [#allocation3], 0
    %s11 = scalar_lea.sflag [#allocation3], 1
    %12 = vsyncpa %s11, 0
    loop: start=0, step=1, limit=4
    $region2: #{tpu_custom_call.1} parent=1 // loop_pre_header
      _
    $region3: #{tpu_custom_call.1} parent=1 // loop_header
      %s14 = sphi 0, %s18
      %p15 = scmp.ge.s32.totalorder %s14, 4
      %s21 = sphi 0, %s33
      %s22 = sphi 0, %s29
      %s23 = sphi 0, %s21
      %s24 = sphi 0, %s22
      %s25 = sphi 0, %s23
      %s26 = sphi 0, %s24
      %s38 = sphi 0, %s40
      %s41 = sphi 0, %s38
      %s42 = sphi 0, %s41
      %s58 = sphi 0, %s42
      %s64 = sphi 0, %s66
      %s67 = sphi 0, %s64
      %s68 = sphi 0, %s67
      %s84 = sphi 0, %s68
      %s88 = sphi 0, %s88
      %s90 = sphi 0, %s88
      %s91 = sphi 0, %s90
      %s105 = sphi 0, %s91
      %s109 = sphi 0, %s109
      %s111 = sphi 0, %s109
      %s112 = sphi 0, %s111
      %s126 = sphi 0, %s112
      %s130 = sphi 0, %s130
      %s132 = sphi 0, %s130
      %s133 = sphi 0, %s132
      %s147 = sphi 0, %s133
      %s155 = sphi 0, %s157
      %s158 = sphi 0, %s155
      %s159 = sphi 0, %s158
      %s175 = sphi 0, %s159
    $region4: #{tpu_custom_call.1} parent=1 // loop_header_branch
      %17 = sbr.rel (%p15) target = $region8
    $region5: #{tpu_custom_call.1} parent=1 // loop_body
      %s19 = ssub.s32 %s14, 1
      %s20 = ssub.s32 %s14, 2
      %s27 = sadd.s32 1, %s22
      %p28 = scmp.ge.s32.totalorder %s27, 1
      %s29 = scalar_select %p28, 0, %s27
      %s30 = sadd.s32 1, %s21
      %s31 = scalar_select %p28, %s30, %s21
      %p32 = scmp.ge.s32.totalorder %s31, 2
      %s33 = scalar_select %p32, 0, %s31
      %s34 = ssub.s32 %s21, %s33
      %s35 = ssub.s32 %s22, %s29
      %s36 = sor.u32 %s34, %s35
      %p37 = scmp.eq.s32.totalorder %s36, 0
      %s39 = sadd.s32 %s38, 1
      %s40 = scalar_select %p37, %s38, %s39
      %p43 = pneg %p37
      %p44 = scmp.eq.s32.totalorder %s14, 1
      %p45 = por %p43, %p44
      %p46 = scmp.ne.s32.totalorder %s38, %s41
      %p47 = scmp.eq.s32.totalorder %s14, 0
      %p48 = por %p46, %p47
      %p49 = scmp.ne.s32.totalorder %s38, %s41
      %p50 = scmp.eq.s32.totalorder %s19, 1
      %p51 = por %p49, %p50
      %p52 = scmp.ne.s32.totalorder %s41, %s42
      %p53 = scmp.eq.s32.totalorder %s19, 0
      %p54 = por %p52, %p53
      %p55 = scmp.ne.s32.totalorder %s41, %s42
      %p56 = scmp.eq.s32.totalorder %s20, 1
      %p57 = por %p55, %p56
      %p59 = scmp.ne.s32.totalorder %s42, %s58
      %p60 = scmp.eq.s32.totalorder %s20, 0
      %p61 = por %p59, %p60
      %s62 = ssub.s32 %s21, %s33
      %p63 = scmp.eq.s32.totalorder %s62, 0
      %s65 = sadd.s32 %s64, 1
      %s66 = scalar_select %p63, %s64, %s65
      %p69 = pneg %p63
      %p70 = scmp.eq.s32.totalorder %s14, 1
      %p71 = por %p69, %p70
      %p72 = scmp.ne.s32.totalorder %s64, %s67
      %p73 = scmp.eq.s32.totalorder %s14, 0
      %p74 = por %p72, %p73
      %p75 = scmp.ne.s32.totalorder %s64, %s67
      %p76 = scmp.eq.s32.totalorder %s19, 1
      %p77 = por %p75, %p76
      %p78 = scmp.ne.s32.totalorder %s67, %s68
      %p79 = scmp.eq.s32.totalorder %s19, 0
      %p80 = por %p78, %p79
      %p81 = scmp.ne.s32.totalorder %s67, %s68
      %p82 = scmp.eq.s32.totalorder %s20, 1
      %p83 = por %p81, %p82
      %p85 = scmp.ne.s32.totalorder %s68, %s84
      %p86 = scmp.eq.s32.totalorder %s20, 0
      %p87 = por %p85, %p86
      %s89 = sadd.s32 %s88, 1
      %p92 = scmp.eq.s32.totalorder %s14, 1
      %p93 = scmp.ne.s32.totalorder %s88, %s90
      %p94 = scmp.eq.s32.totalorder %s14, 0
      %p95 = por %p93, %p94
      %p96 = scmp.ne.s32.totalorder %s88, %s90
      %p97 = scmp.eq.s32.totalorder %s19, 1
      %p98 = por %p96, %p97
      %p99 = scmp.ne.s32.totalorder %s90, %s91
      %p100 = scmp.eq.s32.totalorder %s19, 0
      %p101 = por %p99, %p100
      %p102 = scmp.ne.s32.totalorder %s90, %s91
      %p103 = scmp.eq.s32.totalorder %s20, 1
      %p104 = por %p102, %p103
      %p106 = scmp.ne.s32.totalorder %s91, %s105
      %p107 = scmp.eq.s32.totalorder %s20, 0
      %p108 = por %p106, %p107
      %s110 = sadd.s32 %s109, 1
      %p113 = scmp.eq.s32.totalorder %s14, 1
      %p114 = scmp.ne.s32.totalorder %s109, %s111
      %p115 = scmp.eq.s32.totalorder %s14, 0
      %p116 = por %p114, %p115
      %p117 = scmp.ne.s32.totalorder %s109, %s111
      %p118 = scmp.eq.s32.totalorder %s19, 1
      %p119 = por %p117, %p118
      %p120 = scmp.ne.s32.totalorder %s111, %s112
      %p121 = scmp.eq.s32.totalorder %s19, 0
      %p122 = por %p120, %p121
      %p123 = scmp.ne.s32.totalorder %s111, %s112
      %p124 = scmp.eq.s32.totalorder %s20, 1
      %p125 = por %p123, %p124
      %p127 = scmp.ne.s32.totalorder %s112, %s126
      %p128 = scmp.eq.s32.totalorder %s20, 0
      %p129 = por %p127, %p128
      %s131 = sadd.s32 %s130, 1
      %p134 = scmp.eq.s32.totalorder %s14, 1
      %p135 = scmp.ne.s32.totalorder %s130, %s132
      %p136 = scmp.eq.s32.totalorder %s14, 0
      %p137 = por %p135, %p136
      %p138 = scmp.ne.s32.totalorder %s130, %s132
      %p139 = scmp.eq.s32.totalorder %s19, 1
      %p140 = por %p138, %p139
      %p141 = scmp.ne.s32.totalorder %s132, %s133
      %p142 = scmp.eq.s32.totalorder %s19, 0
      %p143 = por %p141, %p142
      %p144 = scmp.ne.s32.totalorder %s132, %s133
      %p145 = scmp.eq.s32.totalorder %s20, 1
      %p146 = por %p144, %p145
      %p148 = scmp.ne.s32.totalorder %s133, %s147
      %p149 = scmp.eq.s32.totalorder %s20, 0
      %p150 = por %p148, %p149
      %s151 = ssub.s32 %s21, %s33
      %s152 = ssub.s32 %s22, %s29
      %s153 = sor.u32 %s151, %s152
      %p154 = scmp.eq.s32.totalorder %s153, 0
      %s156 = sadd.s32 %s155, 1
      %s157 = scalar_select %p154, %s155, %s156
      %p160 = pneg %p154
      %p161 = scmp.eq.s32.totalorder %s14, 1
      %p162 = por %p160, %p161
      %p163 = scmp.ne.s32.totalorder %s155, %s158
      %p164 = scmp.eq.s32.totalorder %s14, 0
      %p165 = por %p163, %p164
      %p166 = scmp.ne.s32.totalorder %s155, %s158
      %p167 = scmp.eq.s32.totalorder %s19, 1
      %p168 = por %p166, %p167
      %p169 = scmp.ne.s32.totalorder %s158, %s159
      %p170 = scmp.eq.s32.totalorder %s19, 0
      %p171 = por %p169, %p170
      %p172 = scmp.ne.s32.totalorder %s158, %s159
      %p173 = scmp.eq.s32.totalorder %s20, 1
      %p174 = por %p172, %p173
      %p176 = scmp.ne.s32.totalorder %s159, %s175
      %p177 = scmp.eq.s32.totalorder %s20, 0
      %p178 = por %p176, %p177
      %p179 = scmp.le.s32.totalorder 1, %s14
      %p180 = scmp.lt.s32.totalorder %s14, 3
      %p181 = pnand %p179, %p180
      %p182 = pneg %p181
      // Predicated region
      $region9: #{tpu_custom_call.1} parent=5 // pred_check
        _
      $region10: #{tpu_custom_call.1} parent=5 // pred_check_branch
        %184 = sbr.rel (%p181) target = $region12
      $region11: #{tpu_custom_call.1} parent=5 // pred_region
        %s185 = ssub.s32 %s14, 1
        // Predicated region
        $region13: #{tpu_custom_call.1} parent=11 // pred_check
          %p186 = pneg %p101
        $region14: #{tpu_custom_call.1} parent=11 // pred_check_branch
          %188 = sbr.rel (%p186) target = $region16
        $region15: #{tpu_custom_call.1} parent=11 // pred_region
          _
        $region16: #{tpu_custom_call.1} parent=11 // pred_fallthru
          _
        // Predicated region
        $region17: #{tpu_custom_call.1} parent=11 // pred_check
          %p189 = pneg %p122
        $region18: #{tpu_custom_call.1} parent=11 // pred_check_branch
          %191 = sbr.rel (%p189) target = $region20
        $region19: #{tpu_custom_call.1} parent=11 // pred_region
          _
        $region20: #{tpu_custom_call.1} parent=11 // pred_fallthru
          _
        // Predicated region
        $region21: #{tpu_custom_call.1} parent=11 // pred_check
          %p192 = pneg %p143
        $region22: #{tpu_custom_call.1} parent=11 // pred_check_branch
          %194 = sbr.rel (%p192) target = $region24
        $region23: #{tpu_custom_call.1} parent=11 // pred_region
          _
        $region24: #{tpu_custom_call.1} parent=11 // pred_fallthru
          _
      $region12: #{tpu_custom_call.1} parent=5 // pred_fallthru
        _
      %p195 = scmp.lt.s32.totalorder %s14, 2
      // Predicated region
      $region25: #{tpu_custom_call.1} parent=5 // pred_check
        %p196 = pneg %p195
      $region26: #{tpu_custom_call.1} parent=5 // pred_check_branch
        %198 = sbr.rel (%p196) target = $region28
      $region27: #{tpu_custom_call.1} parent=5 // pred_region
        // Predicated region
        $region29: #{tpu_custom_call.1} parent=27 // pred_check
          %p199 = pneg %p48
        $region30: #{tpu_custom_call.1} parent=27 // pred_check_branch
          %201 = sbr.rel (%p199) target = $region32
        $region31: #{tpu_custom_call.1} parent=27 // pred_region
          %s202 = smul.u32 2, %s22
          %p203 = scmp.lt.s32.totalorder %s21, 1
          %s204 = scalar_select %p203, %s21, 1
          %p205 = scmp.lt.s32.totalorder %s202, 1
          %s206 = scalar_select %p205, %s202, 1
          %s207 = smul.addr %s204, 8
          %s208 = sadd.s32 %s206, %s207
          %s209 = smul.addr %s208, 8
          %s210 = scalar_lea.vmem %s0, %s209
          %s211 = smul.u32 2, %s22
        $region32: #{tpu_custom_call.1} parent=27 // pred_fallthru
          _
        // Predicated region
        $region33: #{tpu_custom_call.1} parent=27 // pred_check
          %p212 = pneg %p74
        $region34: #{tpu_custom_call.1} parent=27 // pred_check_branch
          %214 = sbr.rel (%p212) target = $region36
        $region35: #{tpu_custom_call.1} parent=27 // pred_region
          %p215 = scmp.lt.s32.totalorder %s21, 1
          %s216 = scalar_select %p215, %s21, 1
          %s217 = smul.addr %s216, 8
          %s218 = smul.addr %s217, 8
          %s219 = scalar_lea.vmem %s1, %s218
        $region36: #{tpu_custom_call.1} parent=27 // pred_fallthru
          _
      $region28: #{tpu_custom_call.1} parent=5 // pred_fallthru
        _
      %p220 = scmp.le.s32.totalorder 1, %s14
      %p221 = scmp.lt.s32.totalorder %s14, 3
      %p222 = pnand %p220, %p221
      %p223 = pneg %p222
      // Predicated region
      $region37: #{tpu_custom_call.1} parent=5 // pred_check
        _
      $region38: #{tpu_custom_call.1} parent=5 // pred_check_branch
        %225 = sbr.rel (%p222) target = $region40
      $region39: #{tpu_custom_call.1} parent=5 // pred_region
        %s226 = ssub.s32 %s14, 1
        %s227 = smul.u32 2, %s24
        %p228 = scmp.lt.s32.totalorder %s23, 1
        %s229 = scalar_select %p228, %s23, 1
        %p230 = scmp.lt.s32.totalorder %s227, 1
        %s231 = scalar_select %p230, %s227, 1
        %s232 = smul.addr %s229, 8
        %s233 = sadd.s32 %s231, %s232
        %s234 = smul.addr %s233, 8
        %s235 = scalar_lea.vmem %s0, %s234
        %p236 = pneg %p54
        %p237 = pneg %p51
        %p238 = scmp.lt.s32.totalorder %s23, 1
        %s239 = scalar_select %p238, %s23, 1
        %s240 = smul.addr %s239, 8
        %s241 = smul.addr %s240, 8
        %s242 = scalar_lea.vmem %s1, %s241
        %p243 = pneg %p80
        %p244 = pneg %p77
        %p245 = pneg %p101
        %p246 = pneg %p98
        %p247 = pneg %p122
        %p248 = pneg %p119
        %p249 = pneg %p143
        %p250 = pneg %p140
        %p251 = pneg %p171
        %p252 = pneg %p168
        %s253 = sand.u32 %s158, 1
        %s254 = scalar_lea.sflag [#allocation3], %s253
        %s255 = sand.u32 %s158, 1
        %s256 = smul.addr %s255, 4
        %s257 = scalar_lea.vmem [#allocation2], %s256
        %s258 = smul.u32 2, %s24
        %p259 = scmp.lt.s32.totalorder %s23, 1
        %s260 = scalar_select %p259, %s23, 1
        %p261 = scmp.lt.s32.totalorder %s258, 1
        %s262 = scalar_select %p261, %s258, 1
        %s263 = smul.addr %s260, 8
        %s264 = sadd.s32 %s262, %s263
        %s265 = smul.addr %s264, 8
        %s266 = scalar_lea.vmem %s0, %s265
        %s267 = smul.u32 2, %s24
        %p268 = scmp.lt.s32.totalorder %s23, 1
        %s269 = scalar_select %p268, %s23, 1
        %s270 = smul.addr %s269, 8
        %s271 = smul.addr %s270, 8
        %s272 = scalar_lea.vmem %s1, %s271
        %s273 = smul.u32 2, %s24
        %v274 = vld [vmem:[%s266] sm:$0xff]
        %v275 = vld [vmem:[%s266 + $0x8] sm:$0xff]
        %v276 = vld [vmem:[%s266 + $0x10] sm:$0xff]
        %v277 = vld [vmem:[%s266 + $0x18] sm:$0xff]
        %v278 = vld [vmem:[%s266 + $0x20] sm:$0xff]
        %v279 = vld [vmem:[%s266 + $0x28] sm:$0xff]
        %v280 = vld [vmem:[%s266 + $0x30] sm:$0xff]
        %v281 = vld [vmem:[%s266 + $0x38] sm:$0xff]
        %v282 = vld [vmem:[%s272] sm:$0xff]
        %v283 = vld [vmem:[%s272 + $0x8] sm:$0xff]
        %v284 = vld [vmem:[%s272 + $0x10] sm:$0xff]
        %v285 = vld [vmem:[%s272 + $0x18] sm:$0xff]
        %v286 = vld [vmem:[%s272 + $0x20] sm:$0xff]
        %v287 = vld [vmem:[%s272 + $0x28] sm:$0xff]
        %v288 = vld [vmem:[%s272 + $0x30] sm:$0xff]
        %v289 = vld [vmem:[%s272 + $0x38] sm:$0xff]
        %v290 = vld [vmem:[%s2] sm:$0xff]
        %v291 = vld [vmem:[%s2 + $0x8] sm:$0xff]
        %v292 = vld [vmem:[%s2 + $0x10] sm:$0xff]
        %v293 = vld [vmem:[%s2 + $0x18] sm:$0xff]
        %v294 = vld [vmem:[%s2 + $0x20] sm:$0xff]
        %v295 = vld [vmem:[%s2 + $0x28] sm:$0xff]
        %v296 = vld [vmem:[%s2 + $0x30] sm:$0xff]
        %v297 = vld [vmem:[%s2 + $0x38] sm:$0xff]
        %vm298 = vcmask 261120
        %v300 = vsel %vm298, %v290, 0
        %v303 = vsel %vm298, %v291, 0
        %v306 = vsel %vm298, %v292, 0
        %v309 = vsel %vm298, %v293, 0
        %v312 = vsel %vm298, %v294, 0
        %v315 = vsel %vm298, %v295, 0
        %v318 = vsel %vm298, %v296, 0
        %v321 = vsel %vm298, %v297, 0
        %323 = vmatpush.msra.mxu0 0.0
        %324 = vmatpush.msra.mxu0 0.0
        %325 = vmatpush.msra.mxu0 0.0
        %326 = vmatpush.msra.mxu0 0.0
        %327 = vmatpush.msra.mxu0 0.0
        %328 = vmatpush.msra.mxu0 0.0
        %329 = vmatpush.msra.mxu0 0.0
        %330 = vmatpush.msra.mxu0 0.0
        %331 = vmatpush.msra.mxu0 0.0
        %332 = vmatpush.msra.mxu0 0.0
        %333 = vmatpush.msra.mxu0 0.0
        %334 = vmatpush.msra.mxu0 0.0
        %335 = vmatpush.msra.mxu0 %v280
        %336 = vmatpush.msra.mxu0 %v278
        %337 = vmatpush.msra.mxu0 %v276
        %338 = vmatpush.msra.mxu0 %v274
        %339 = vmatmul.f32.gmra.mxu0 %v300
        %v340 = vpop.f32.mrf.mxu0
        %v341 = vadd.f32 0.0, %v340
        %342 = vmatmul.f32.gmra.mxu0 %v303
        %v343 = vpop.f32.mrf.mxu0
        %v344 = vadd.f32 0.0, %v343
        %345 = vmatmul.f32.gmra.mxu0 %v306
        %v346 = vpop.f32.mrf.mxu0
        %v347 = vadd.f32 0.0, %v346
        %348 = vmatmul.f32.gmra.mxu0 %v309
        %v349 = vpop.f32.mrf.mxu0
        %v350 = vadd.f32 0.0, %v349
        %351 = vmatmul.f32.gmra.mxu0 %v312
        %v352 = vpop.f32.mrf.mxu0
        %v353 = vadd.f32 0.0, %v352
        %354 = vmatmul.f32.gmra.mxu0 %v315
        %v355 = vpop.f32.mrf.mxu0
        %v356 = vadd.f32 0.0, %v355
        %357 = vmatmul.f32.gmra.mxu0 %v318
        %v358 = vpop.f32.mrf.mxu0
        %v359 = vadd.f32 0.0, %v358
        %360 = vmatmul.f32.gmra.mxu0 %v321
        %v361 = vpop.f32.mrf.mxu0
        %v362 = vadd.f32 0.0, %v361
        %363 = vdwg.mxu0
        %364 = vmatpush.msra.mxu0 0.0
        %365 = vmatpush.msra.mxu0 0.0
        %366 = vmatpush.msra.mxu0 0.0
        %367 = vmatpush.msra.mxu0 0.0
        %368 = vmatpush.msra.mxu0 0.0
        %369 = vmatpush.msra.mxu0 0.0
        %370 = vmatpush.msra.mxu0 0.0
        %371 = vmatpush.msra.mxu0 0.0
        %372 = vmatpush.msra.mxu0 0.0
        %373 = vmatpush.msra.mxu0 0.0
        %374 = vmatpush.msra.mxu0 0.0
        %375 = vmatpush.msra.mxu0 0.0
        %376 = vmatpush.msra.mxu0 %v281
        %377 = vmatpush.msra.mxu0 %v279
        %378 = vmatpush.msra.mxu0 %v277
        %379 = vmatpush.msra.mxu0 %v275
        %380 = vmatmul.f32.gmra.mxu0 %v300
        %v381 = vpop.f32.mrf.mxu0
        %v382 = vadd.f32 0.0, %v381
        %383 = vmatmul.f32.gmra.mxu0 %v303
        %v384 = vpop.f32.mrf.mxu0
        %v385 = vadd.f32 0.0, %v384
        %386 = vmatmul.f32.gmra.mxu0 %v306
        %v387 = vpop.f32.mrf.mxu0
        %v388 = vadd.f32 0.0, %v387
        %389 = vmatmul.f32.gmra.mxu0 %v309
        %v390 = vpop.f32.mrf.mxu0
        %v391 = vadd.f32 0.0, %v390
        %392 = vmatmul.f32.gmra.mxu0 %v312
        %v393 = vpop.f32.mrf.mxu0
        %v394 = vadd.f32 0.0, %v393
        %395 = vmatmul.f32.gmra.mxu0 %v315
        %v396 = vpop.f32.mrf.mxu0
        %v397 = vadd.f32 0.0, %v396
        %398 = vmatmul.f32.gmra.mxu0 %v318
        %v399 = vpop.f32.mrf.mxu0
        %v400 = vadd.f32 0.0, %v399
        %401 = vmatmul.f32.gmra.mxu0 %v321
        %v402 = vpop.f32.mrf.mxu0
        %v403 = vadd.f32 0.0, %v402
        %404 = vdwg.mxu0
        %406 = vset.pattern.permute.xlu0 0
        %407 = vperm.xlu0 %406, %v282
        %v408 = vpop.permute.xlu0 %407
        %411 = vset.pattern.permute.xlu0 0
        %412 = vperm.xlu0 %411, %v283
        %v413 = vpop.permute.xlu0 %412
        %416 = vset.pattern.permute.xlu0 0
        %417 = vperm.xlu0 %416, %v284
        %v418 = vpop.permute.xlu0 %417
        %421 = vset.pattern.permute.xlu0 0
        %422 = vperm.xlu0 %421, %v285
        %v423 = vpop.permute.xlu0 %422
        %426 = vset.pattern.permute.xlu0 0
        %427 = vperm.xlu0 %426, %v286
        %v428 = vpop.permute.xlu0 %427
        %431 = vset.pattern.permute.xlu0 0
        %432 = vperm.xlu0 %431, %v287
        %v433 = vpop.permute.xlu0 %432
        %436 = vset.pattern.permute.xlu0 0
        %437 = vperm.xlu0 %436, %v288
        %v438 = vpop.permute.xlu0 %437
        %441 = vset.pattern.permute.xlu0 0
        %442 = vperm.xlu0 %441, %v289
        %v443 = vpop.permute.xlu0 %442
        %v445 = vsub.f32 %v341, %v408
        %v446 = vsub.f32 %v382, %v408
        %v447 = vsub.f32 %v344, %v413
        %v448 = vsub.f32 %v385, %v413
        %v449 = vsub.f32 %v347, %v418
        %v450 = vsub.f32 %v388, %v418
        %v451 = vsub.f32 %v350, %v423
        %v452 = vsub.f32 %v391, %v423
        %v453 = vsub.f32 %v353, %v428
        %v454 = vsub.f32 %v394, %v428
        %v455 = vsub.f32 %v356, %v433
        %v456 = vsub.f32 %v397, %v433
        %v457 = vsub.f32 %v359, %v438
        %v458 = vsub.f32 %v400, %v438
        %v459 = vsub.f32 %v362, %v443
        %v460 = vsub.f32 %v403, %v443
        %v461 = vadd.f32 %v341, %v408
        %v462 = vadd.f32 %v382, %v408
        %v463 = vadd.f32 %v344, %v413
        %v464 = vadd.f32 %v385, %v413
        %v465 = vadd.f32 %v347, %v418
        %v466 = vadd.f32 %v388, %v418
        %v467 = vadd.f32 %v350, %v423
        %v468 = vadd.f32 %v391, %v423
        %v469 = vadd.f32 %v353, %v428
        %v470 = vadd.f32 %v394, %v428
        %v471 = vadd.f32 %v356, %v433
        %v472 = vadd.f32 %v397, %v433
        %v473 = vadd.f32 %v359, %v438
        %v474 = vadd.f32 %v400, %v438
        %v475 = vadd.f32 %v362, %v443
        %v476 = vadd.f32 %v403, %v443
        %v477 = vmax.f32 %v461, 0.0
        %v478 = vmax.f32 %v462, 0.0
        %v479 = vmax.f32 %v463, 0.0
        %v480 = vmax.f32 %v464, 0.0
        %v481 = vmax.f32 %v465, 0.0
        %v482 = vmax.f32 %v466, 0.0
        %v483 = vmax.f32 %v467, 0.0
        %v484 = vmax.f32 %v468, 0.0
        %v485 = vmax.f32 %v469, 0.0
        %v486 = vmax.f32 %v470, 0.0
        %v487 = vmax.f32 %v471, 0.0
        %v488 = vmax.f32 %v472, 0.0
        %v489 = vmax.f32 %v473, 0.0
        %v490 = vmax.f32 %v474, 0.0
        %v491 = vmax.f32 %v475, 0.0
        %v492 = vmax.f32 %v476, 0.0
        %v493 = vmul.f32 %v445, %v445
        %v494 = vmul.f32 %v446, %v446
        %v495 = vmul.f32 %v447, %v447
        %v496 = vmul.f32 %v448, %v448
        %v497 = vmul.f32 %v449, %v449
        %v498 = vmul.f32 %v450, %v450
        %v499 = vmul.f32 %v451, %v451
        %v500 = vmul.f32 %v452, %v452
        %v501 = vmul.f32 %v453, %v453
        %v502 = vmul.f32 %v454, %v454
        %v503 = vmul.f32 %v455, %v455
        %v504 = vmul.f32 %v456, %v456
        %v505 = vmul.f32 %v457, %v457
        %v506 = vmul.f32 %v458, %v458
        %v507 = vmul.f32 %v459, %v459
        %v508 = vmul.f32 %v460, %v460
        %v509 = vsub.f32 %v477, %v493
        %v510 = vsub.f32 %v478, %v494
        %v511 = vsub.f32 %v479, %v495
        %v512 = vsub.f32 %v480, %v496
        %v513 = vsub.f32 %v481, %v497
        %v514 = vsub.f32 %v482, %v498
        %v515 = vsub.f32 %v483, %v499
        %v516 = vsub.f32 %v484, %v500
        %v517 = vsub.f32 %v485, %v501
        %v518 = vsub.f32 %v486, %v502
        %v519 = vsub.f32 %v487, %v503
        %v520 = vsub.f32 %v488, %v504
        %v521 = vsub.f32 %v489, %v505
        %v522 = vsub.f32 %v490, %v506
        %v523 = vsub.f32 %v491, %v507
        %v524 = vsub.f32 %v492, %v508
        %v525 = vld [vmem:[%s3] sm:$0x3]
        %v526 = vld [vmem:[%s4] sm:$0x3]
        %528 = vset.pattern.permute.xlu0 0
        %529 = vperm.xlu0 %528, %v526
        %v530 = vpop.permute.xlu0 %529
        %vm532 = vcmask 523264
        %v534 = vsel %vm532, %v525, 0
        %536 = vmatpush.msra.mxu0 0.0
        %537 = vmatpush.msra.mxu0 0.0
        %538 = vmatpush.msra.mxu0 0.0
        %539 = vmatpush.msra.mxu0 0.0
        %540 = vmatpush.msra.mxu0 0.0
        %541 = vmatpush.msra.mxu0 0.0
        %542 = vmatpush.msra.mxu0 0.0
        %543 = vmatpush.msra.mxu0 0.0
        %544 = vmatpush.msra.mxu0 %v523
        %545 = vmatpush.msra.mxu0 %v521
        %546 = vmatpush.msra.mxu0 %v519
        %547 = vmatpush.msra.mxu0 %v517
        %548 = vmatpush.msra.mxu0 %v515
        %549 = vmatpush.msra.mxu0 %v513
        %550 = vmatpush.msra.mxu0 %v511
        %551 = vmatpush.msra.mxu0 %v509
        %552 = vmatmul.f32.gmra.mxu0 %v534
        %v553 = vpop.f32.mrf.mxu0
        %v554 = vadd.f32 %v530, %v553
        %555 = vdwg.mxu0
        %556 = vmatpush.msra.mxu0 0.0
        %557 = vmatpush.msra.mxu0 0.0
        %558 = vmatpush.msra.mxu0 0.0
        %559 = vmatpush.msra.mxu0 0.0
        %560 = vmatpush.msra.mxu0 0.0
        %561 = vmatpush.msra.mxu0 0.0
        %562 = vmatpush.msra.mxu0 0.0
        %563 = vmatpush.msra.mxu0 0.0
        %564 = vmatpush.msra.mxu0 %v524
        %565 = vmatpush.msra.mxu0 %v522
        %566 = vmatpush.msra.mxu0 %v520
        %567 = vmatpush.msra.mxu0 %v518
        %568 = vmatpush.msra.mxu0 %v516
        %569 = vmatpush.msra.mxu0 %v514
        %570 = vmatpush.msra.mxu0 %v512
        %571 = vmatpush.msra.mxu0 %v510
        %572 = vmatmul.f32.gmra.mxu0 %v534
        %v573 = vpop.f32.mrf.mxu0
        %v574 = vadd.f32 %v530, %v573
        %575 = vdwg.mxu0
        %v578 = vrot.slane %v574, 6
        %vm579 = vcmask 1041408
        %v580 = vsel %vm579, %v554, %v578
        %582 = vst [vmem:[%s257] sm:$0xf] %v580
        %s583 = sand.u32 %s158, 1
        %s584 = scalar_lea.sflag [#allocation3], %s583
        %s585 = sand.u32 %s158, 1
        %s586 = smul.addr %s585, 4
        %s587 = scalar_lea.vmem [#allocation2], %s586
        // Predicated region
        $region41: #{tpu_custom_call.1} parent=39 // pred_check
          %p588 = pneg %p168
        $region42: #{tpu_custom_call.1} parent=39 // pred_check_branch
          %590 = sbr.rel (%p588) target = $region44
        $region43: #{tpu_custom_call.1} parent=39 // pred_region
          %s591 = smul.u32 2, %s24
          %593 = vsyncadd %s584, 0
          %s594 = smul.addr %s23, 2
          %s595 = sadd.s32 %s591, %s594
          %s596 = smul.addr %s595, 2
          %s597 = scalar_lea.hbm %s5, %s596
          %s599 = sshll.u32 %s587, 4
          %s600 = int_to_ptr.vmem [resolvable:$true] %s599
          %s601 = sshll.u32 %s597, 4
          %s602 = int_to_ptr.hbm [resolvable:$true] %s601
          %604 = dma.vmem_to_hbm [thread:$0]  %s600, 64, %s602, %s584
        $region44: #{tpu_custom_call.1} parent=39 // pred_fallthru
          _
      $region40: #{tpu_custom_call.1} parent=5 // pred_fallthru
        _
      %p605 = scmp.le.s32.totalorder 2, %s14
      // Predicated region
      $region45: #{tpu_custom_call.1} parent=5 // pred_check
        %p606 = pneg %p605
      $region46: #{tpu_custom_call.1} parent=5 // pred_check_branch
        %608 = sbr.rel (%p606) target = $region48
      $region47: #{tpu_custom_call.1} parent=5 // pred_region
        %s609 = ssub.s32 %s14, 2
        // Predicated region
        $region49: #{tpu_custom_call.1} parent=47 // pred_check
          %p610 = pneg %p174
        $region50: #{tpu_custom_call.1} parent=47 // pred_check_branch
          %612 = sbr.rel (%p610) target = $region52
        $region51: #{tpu_custom_call.1} parent=47 // pred_region
          %s613 = sand.u32 %s159, 1
          %s614 = scalar_lea.sflag [#allocation3], %s613
          %s615 = sand.u32 %s159, 1
          %s616 = smul.addr %s615, 4
          %s617 = scalar_lea.vmem [#allocation2], %s616
          %619 = dma.done %s614, 64
        $region52: #{tpu_custom_call.1} parent=47 // pred_fallthru
          _
      $region48: #{tpu_custom_call.1} parent=5 // pred_fallthru
        _
    $region6: #{tpu_custom_call.1} parent=1 // loop_footer
      %s18 = sadd.s32 1, %s14
    $region7: #{tpu_custom_call.1} parent=1 // loop_footer_branch
      %13 = sbr.rel target = $region3
    $region8: #{tpu_custom_call.1} parent=1 // loop_exit
      _
    %620 = vsyncpa [#allocation3], 1
    %s621 = scalar_lea.sflag [#allocation3], 1
    %622 = vsyncpa %s621, 1

</llo_original>
